<compile_context>
chip_gen: v7x
topology: tpu7x:2x2x1
jax: 0.10.0
libtpu: 0.0.40
codegen_flags: <defaults>
</compile_context>

<pallas_src>
import jax
import jax.numpy as jnp
from jax.experimental import pallas as pl
from jax.experimental.pallas import tpu as pltpu


def _mlp_q_kernel(x_ref, w1_ref, b1_ref, w2_ref, b2_ref, w3_ref, b3_ref, o_ref):
    """Fused 3-layer MLP, transposed layout: (Linear -> ReLU) x 2 -> Linear."""
    x = x_ref[...]                                                     # (obs_dim, TB)
    h = jnp.dot(w1_ref[...], x, preferred_element_type=jnp.float32) + b1_ref[...]
    h = jnp.maximum(h, 0.0)                                            # (H1, TB)
    h = jnp.dot(w2_ref[...], h, preferred_element_type=jnp.float32) + b2_ref[...]
    h = jnp.maximum(h, 0.0)                                            # (H2, TB)
    q = jnp.dot(w3_ref[...], h, preferred_element_type=jnp.float32) + b3_ref[...]
    o_ref[...] = q.astype(o_ref.dtype)                                 # (act_dim, TB)


def mlp_q_forward(obs, params, *, block_b=16384):
    """Run the fused MLP kernel.

    obs: (B, obs_dim) float32.
    params: ((w1,b1),(w2,b2),(w3,b3)), all in PyTorch nn.Linear layout
            weight (out, in), bias stored as a column (out, 1).
    Returns torch.squeeze(q, -1) semantics: (B,) when act_dim == 1 else (B, act_dim).
    """
    (w1, b1), (w2, b2), (w3, b3) = params
    B, obs_dim = obs.shape
    h1 = w1.shape[0]
    h2 = w2.shape[0]
    act_dim = w3.shape[0]

    assert block_b % 128 == 0, "block_b must be a multiple of 128"

    # Batch-on-lanes staging (layout plumbing, not compute hoisting).
    obs_t = obs.T                                   # (obs_dim, B), lane-dense batch

    if B <= 256:
        # Single tile: block == full array on the batch dim (no 128-alignment needed).
        TB = B
    else:
        # At least 2 grid steps so v7x's two TensorCores both get work; tile is a
        # multiple of 128 so the lane-dense blocks satisfy the (8, 128) rule.
        half = pl.cdiv(B, 2)
        TB = min(block_b, pl.cdiv(half, 128) * 128)

    grid = (pl.cdiv(B, TB),)                        # ragged final block allowed

    q = pl.pallas_call(
        _mlp_q_kernel,
        out_shape=jax.ShapeDtypeStruct((act_dim, B), jnp.float32),
        grid=grid,
        in_specs=[
            # obs tile marches along the (lane) batch axis; weights stay resident.
            pl.BlockSpec((obs_dim, TB), lambda i: (0, i)),
            pl.BlockSpec((h1, obs_dim), lambda i: (0, 0)),
            pl.BlockSpec((h1, 1), lambda i: (0, 0)),
            pl.BlockSpec((h2, h1), lambda i: (0, 0)),
            pl.BlockSpec((h2, 1), lambda i: (0, 0)),
            pl.BlockSpec((act_dim, h2), lambda i: (0, 0)),
            pl.BlockSpec((act_dim, 1), lambda i: (0, 0)),
        ],
        out_specs=pl.BlockSpec((act_dim, TB), lambda i: (0, i)),
        compiler_params=pltpu.CompilerParams(
            dimension_semantics=("parallel",),
            vmem_limit_bytes=32 << 20,
        ),
    )(obs_t, w1, b1, w2, b2, w3, b3)

    if act_dim == 1:             # torch.squeeze(q, -1) drops the size-1 head dim
        return q[0]              # (B,)
    return q.T                   # (B, act_dim); squeeze(-1) is a no-op here


def init_linear_params(key, fan_in, fan_out):
    """PyTorch-style nn.Linear init: U(-1/sqrt(fan_in), 1/sqrt(fan_in)).

    weight: (out, in)  (native PyTorch layout; kernel computes W @ x_t + b)
    bias:   (out, 1)   (column, broadcasts along the lane/batch axis)
    """
    kw, kb = jax.random.split(key)
    bound = 1.0 / jnp.sqrt(jnp.float32(fan_in))
    w = jax.random.uniform(kw, (fan_out, fan_in), jnp.float32, -bound, bound)
    b = jax.random.uniform(kb, (fan_out, 1), jnp.float32, -bound, bound)
    return w, b


def _ref_forward(obs, params):
    """Pure-JAX reference of the same forward pass (PyTorch semantics)."""
    (w1, b1), (w2, b2), (w3, b3) = params
    h = jnp.maximum(obs @ w1.T + b1[:, 0], 0.0)
    h = jnp.maximum(h @ w2.T + b2[:, 0], 0.0)
    q = h @ w3.T + b3[:, 0]                        # (B, act_dim)
    return jnp.squeeze(q, axis=-1) if q.shape[-1] == 1 else q


if __name__ == "__main__":
    # Small shapes consistent with MLPQFunction(obs_dim, act_dim, hidden_sizes, ReLU)
    obs_dim = 16
    act_dim = 1            # Q-function head; squeeze(-1) removes it
    hidden_sizes = (32, 32)

    root = jax.random.PRNGKey(0)
    k_obs, k_obs2, k1, k2, k3 = jax.random.split(root, 5)

    params = (
        init_linear_params(k1, obs_dim, hidden_sizes[0]),
        init_linear_params(k2, hidden_sizes[0], hidden_sizes[1]),
        init_linear_params(k3, hidden_sizes[1], act_dim),
    )

    # --- Case 1: small batch, single-tile path ---
    batch = 8
    obs = jax.random.normal(k_obs, (batch, obs_dim), jnp.float32)
    q = mlp_q_forward(obs, params)
    jax.block_until_ready(q)
    ref = _ref_forward(obs, params)
    assert q.shape == (batch,), q.shape
    assert jnp.allclose(q, ref, atol=1e-4, rtol=1e-4)

    # --- Case 2: batch > 256 -> exercises the tiled path with >= 2 grid steps and
    # a ragged final block (TB = 256, grid = 2, last block only 44 valid columns).
    batch2 = 300
    obs2 = jax.random.normal(k_obs2, (batch2, obs_dim), jnp.float32)
    q2 = mlp_q_forward(obs2, params)
    jax.block_until_ready(q2)
    ref2 = _ref_forward(obs2, params)
    assert q2.shape == (batch2,), q2.shape
    assert jnp.allclose(q2, ref2, atol=1e-4, rtol=1e-4)

    print("KERNEL_OK")
</pallas_src>

<mosaic_0001>
module attributes {stable_mosaic.version = 11 : i64} {
  func.func @_mlp_q_kernel(%arg0: i32, %arg1: memref<16x8xf32, #tpu.memory_space<vmem>>, %arg2: memref<32x16xf32, #tpu.memory_space<vmem>>, %arg3: memref<32x1xf32, #tpu.memory_space<vmem>>, %arg4: memref<32x32xf32, #tpu.memory_space<vmem>>, %arg5: memref<32x1xf32, #tpu.memory_space<vmem>>, %arg6: memref<1x32xf32, #tpu.memory_space<vmem>>, %arg7: memref<1x1xf32, #tpu.memory_space<vmem>>, %arg8: memref<1x8xf32, #tpu.memory_space<vmem>>) attributes {dimension_semantics = [#tpu.dimension_semantics<parallel>], iteration_bounds = array<i64: 1>, scalar_prefetch = 0 : i64, scratch_operands = 0 : i64, tpu.core_type = #tpu.core_type<tc>, window_params = [{transform_indices = @transform_0, window_bounds = array<i64: 16, 8>}, {pipeline_mode = #tpu.pipeline_mode<synchronous>, transform_indices = @transform_1, window_bounds = array<i64: 32, 16>}, {pipeline_mode = #tpu.pipeline_mode<synchronous>, transform_indices = @transform_2, window_bounds = array<i64: 32, 1>}, {pipeline_mode = #tpu.pipeline_mode<synchronous>, transform_indices = @transform_3, window_bounds = array<i64: 32, 32>}, {pipeline_mode = #tpu.pipeline_mode<synchronous>, transform_indices = @transform_4, window_bounds = array<i64: 32, 1>}, {pipeline_mode = #tpu.pipeline_mode<synchronous>, transform_indices = @transform_5, window_bounds = array<i64: 1, 32>}, {pipeline_mode = #tpu.pipeline_mode<synchronous>, transform_indices = @transform_6, window_bounds = array<i64: 1, 1>}, {transform_indices = @transform_7, window_bounds = array<i64: 1, 8>}]} {
    %c0 = arith.constant 0 : index
    %c0_0 = arith.constant 0 : index
    %0 = vector.load %arg1[%c0, %c0_0] : memref<16x8xf32, #tpu.memory_space<vmem>>, vector<16x8xf32>
    %c0_1 = arith.constant 0 : index
    %c0_2 = arith.constant 0 : index
    %1 = vector.load %arg2[%c0_1, %c0_2] : memref<32x16xf32, #tpu.memory_space<vmem>>, vector<32x16xf32>
    %cst = arith.constant dense<0.000000e+00> : vector<32x8xf32>
    %2 = tpu.matmul %1, %0, %cst {dimension_numbers = #tpu.dot_dimension_numbers<[1], [0], [0], [1], [0, 0, 1, 1], [], []>} : vector<32x16xf32>, vector<16x8xf32>, vector<32x8xf32> -> vector<32x8xf32>
    %c0_3 = arith.constant 0 : index
    %c0_4 = arith.constant 0 : index
    %3 = vector.load %arg3[%c0_3, %c0_4] : memref<32x1xf32, #tpu.memory_space<vmem>>, vector<32x1xf32>
    %4 = vector.broadcast %3 : vector<32x1xf32> to vector<32x8xf32>
    %5 = arith.addf %2, %4 : vector<32x8xf32>
    %cst_5 = arith.constant 0.000000e+00 : f32
    %6 = vector.broadcast %cst_5 : f32 to vector<32x8xf32>
    %7 = arith.maximumf %5, %6 : vector<32x8xf32>
    %c0_6 = arith.constant 0 : index
    %c0_7 = arith.constant 0 : index
    %8 = vector.load %arg4[%c0_6, %c0_7] : memref<32x32xf32, #tpu.memory_space<vmem>>, vector<32x32xf32>
    %cst_8 = arith.constant dense<0.000000e+00> : vector<32x8xf32>
    %9 = tpu.matmul %8, %7, %cst_8 {dimension_numbers = #tpu.dot_dimension_numbers<[1], [0], [0], [1], [0, 0, 1, 1], [], []>} : vector<32x32xf32>, vector<32x8xf32>, vector<32x8xf32> -> vector<32x8xf32>
    %c0_9 = arith.constant 0 : index
    %c0_10 = arith.constant 0 : index
    %10 = vector.load %arg5[%c0_9, %c0_10] : memref<32x1xf32, #tpu.memory_space<vmem>>, vector<32x1xf32>
    %11 = vector.broadcast %10 : vector<32x1xf32> to vector<32x8xf32>
    %12 = arith.addf %9, %11 : vector<32x8xf32>
    %cst_11 = arith.constant 0.000000e+00 : f32
    %13 = vector.broadcast %cst_11 : f32 to vector<32x8xf32>
    %14 = arith.maximumf %12, %13 : vector<32x8xf32>
    %c0_12 = arith.constant 0 : index
    %c0_13 = arith.constant 0 : index
    %15 = vector.load %arg6[%c0_12, %c0_13] : memref<1x32xf32, #tpu.memory_space<vmem>>, vector<1x32xf32>
    %cst_14 = arith.constant dense<0.000000e+00> : vector<1x8xf32>
    %16 = tpu.matmul %15, %14, %cst_14 {dimension_numbers = #tpu.dot_dimension_numbers<[1], [0], [0], [1], [0, 0, 1, 1], [], []>} : vector<1x32xf32>, vector<32x8xf32>, vector<1x8xf32> -> vector<1x8xf32>
    %c0_15 = arith.constant 0 : index
    %c0_16 = arith.constant 0 : index
    %17 = vector.load %arg7[%c0_15, %c0_16] : memref<1x1xf32, #tpu.memory_space<vmem>>, vector<1x1xf32>
    %18 = vector.broadcast %17 : vector<1x1xf32> to vector<1x8xf32>
    %19 = arith.addf %16, %18 : vector<1x8xf32>
    %c0_17 = arith.constant 0 : index
    %c0_18 = arith.constant 0 : index
    %20 = vector.load %arg8[%c0_17, %c0_18] : memref<1x8xf32, #tpu.memory_space<vmem>>, vector<1x8xf32>
    tpu.vector_store %arg8[%c0_17, %c0_18], %19 {strides = array<i32>} : memref<1x8xf32, #tpu.memory_space<vmem>>, vector<1x8xf32>,
    return
  }
  func.func @transform_0(%arg0: i32) -> (i32, i32) {
    %c0_i32 = arith.constant 0 : i32
    %c0_i32_0 = arith.constant 0 : i32
    return %c0_i32, %arg0 : i32, i32
  }
  func.func @transform_1(%arg0: i32) -> (i32, i32) {
    %c0_i32 = arith.constant 0 : i32
    %c0_i32_0 = arith.constant 0 : i32
    %c0_i32_1 = arith.constant 0 : i32
    return %c0_i32, %c0_i32_0 : i32, i32
  }
  func.func @transform_2(%arg0: i32) -> (i32, i32) {
    %c0_i32 = arith.constant 0 : i32
    %c0_i32_0 = arith.constant 0 : i32
    %c0_i32_1 = arith.constant 0 : i32
    return %c0_i32, %c0_i32_0 : i32, i32
  }
  func.func @transform_3(%arg0: i32) -> (i32, i32) {
    %c0_i32 = arith.constant 0 : i32
    %c0_i32_0 = arith.constant 0 : i32
    %c0_i32_1 = arith.constant 0 : i32
    return %c0_i32, %c0_i32_0 : i32, i32
  }
  func.func @transform_4(%arg0: i32) -> (i32, i32) {
    %c0_i32 = arith.constant 0 : i32
    %c0_i32_0 = arith.constant 0 : i32
    %c0_i32_1 = arith.constant 0 : i32
    return %c0_i32, %c0_i32_0 : i32, i32
  }
  func.func @transform_5(%arg0: i32) -> (i32, i32) {
    %c0_i32 = arith.constant 0 : i32
    %c0_i32_0 = arith.constant 0 : i32
    %c0_i32_1 = arith.constant 0 : i32
    return %c0_i32, %c0_i32_0 : i32, i32
  }
  func.func @transform_6(%arg0: i32) -> (i32, i32) {
    %c0_i32 = arith.constant 0 : i32
    %c0_i32_0 = arith.constant 0 : i32
    %c0_i32_1 = arith.constant 0 : i32
    return %c0_i32, %c0_i32_0 : i32, i32
  }
  func.func @transform_7(%arg0: i32) -> (i32, i32) {
    %c0_i32 = arith.constant 0 : i32
    %c0_i32_0 = arith.constant 0 : i32
    return %c0_i32, %arg0 : i32, i32
  }
}

</mosaic_0001>

<llo_original>
// kernel: tpu_custom_call.1
$region0: #{tpu_custom_call.1}
  #allocation0 [shape = 'u32[]', space=smem, size = 0x4, offset = 0x4, fixed_abs, tag = 'smem constant byte address 0x4 - core index']
  #allocation1 [shape = 'u32[144,128]{1,0:T(1,128)}', space=vmem, size = 0x12000, scoped, tag = 'internal scratch']
  #allocation2 [shape = 'f32[1,1]{1,0:T(1,128)S(1)}', space=vmem, size = 0x200, scoped, tag = 'scoped memory for tpu_custom_call.1']
  %s0 = inlined_call_operand.vmem [shape: f32[16,8], index: 0, kind: input, shape index: {}]
  %s1 = inlined_call_operand.vmem [shape: f32[32,16], index: 1, kind: input, shape index: {}]
  %s2 = inlined_call_operand.vmem [shape: f32[32,1], index: 2, kind: input, shape index: {}]
  %s3 = inlined_call_operand.vmem [shape: f32[32,32], index: 3, kind: input, shape index: {}]
  %s4 = inlined_call_operand.vmem [shape: f32[32,1], index: 4, kind: input, shape index: {}]
  %s5 = inlined_call_operand.vmem [shape: f32[1,32], index: 5, kind: input, shape index: {}]
  %s6 = inlined_call_operand.<no memory space> [shape: f32[1,1], index: 6, kind: input, shape index: {}]
  %s7 = inlined_call_operand.hbm [shape: f32[1,8], index: 7, kind: output, shape index: {}]
  %s8 = sld [smem:[#allocation0]]
  $region38: #{tpu_custom_call.1} parent=0
    _
  %s10 = ssub.s32 1, %s8
  %s11 = scalar_select 0, %s10, %s8
  %v12 = vstv %s6
  %13 = vst [vmem:[#allocation2] sm:$0x1] %v12
  $region1: #{tpu_custom_call.1} parent=0
    #allocation3 [shape = 'u8[512]{0}', space=vmem, size = 0x400, scoped, tag = 'output window, operand 0, single buffered']
    #allocation4 [shape = 's32[1]{0}', space=sflag, size = 0x4, scoped, tag = 'scoped memory for tpu_custom_call.1']
    %14 = vsyncpa [#allocation4], 0
    // Predicated region
    $region2: #{tpu_custom_call.1} parent=1 // pred_check
      _
    $region3: #{tpu_custom_call.1} parent=1 // pred_check_branch
      %16 = sbr.rel (0) target = $region5
    $region4: #{tpu_custom_call.1} parent=1 // pred_region
      _
    $region5: #{tpu_custom_call.1} parent=1 // pred_fallthru
      _
    // Predicated region
    $region6: #{tpu_custom_call.1} parent=1 // pred_check
      _
    $region7: #{tpu_custom_call.1} parent=1 // pred_check_branch
      %18 = sbr.rel (0) target = $region9
    $region8: #{tpu_custom_call.1} parent=1 // pred_region
      _
    $region9: #{tpu_custom_call.1} parent=1 // pred_fallthru
      _
    // Predicated region
    $region10: #{tpu_custom_call.1} parent=1 // pred_check
      _
    $region11: #{tpu_custom_call.1} parent=1 // pred_check_branch
      %20 = sbr.rel (0) target = $region13
    $region12: #{tpu_custom_call.1} parent=1 // pred_region
      _
    $region13: #{tpu_custom_call.1} parent=1 // pred_fallthru
      _
    // Predicated region
    $region14: #{tpu_custom_call.1} parent=1 // pred_check
      _
    $region15: #{tpu_custom_call.1} parent=1 // pred_check_branch
      %22 = sbr.rel (0) target = $region17
    $region16: #{tpu_custom_call.1} parent=1 // pred_region
      _
    $region17: #{tpu_custom_call.1} parent=1 // pred_fallthru
      _
    // Predicated region
    $region18: #{tpu_custom_call.1} parent=1 // pred_check
      _
    $region19: #{tpu_custom_call.1} parent=1 // pred_check_branch
      %24 = sbr.rel (0) target = $region21
    $region20: #{tpu_custom_call.1} parent=1 // pred_region
      _
    $region21: #{tpu_custom_call.1} parent=1 // pred_fallthru
      _
    // Predicated region
    $region22: #{tpu_custom_call.1} parent=1 // pred_check
      _
    $region23: #{tpu_custom_call.1} parent=1 // pred_check_branch
      %26 = sbr.rel (0) target = $region25
    $region24: #{tpu_custom_call.1} parent=1 // pred_region
      _
    $region25: #{tpu_custom_call.1} parent=1 // pred_fallthru
      _
    // Predicated region
    $region26: #{tpu_custom_call.1} parent=1 // pred_check
      _
    $region27: #{tpu_custom_call.1} parent=1 // pred_check_branch
      %28 = sbr.rel (0) target = $region29
    $region28: #{tpu_custom_call.1} parent=1 // pred_region
      _
    $region29: #{tpu_custom_call.1} parent=1 // pred_fallthru
      _
    %v29 = vld [vmem:[%s0] sm:$0xff]
    %v30 = vld [vmem:[%s0 + $0x8] sm:$0xff]
    %v31 = vld [vmem:[%s1] sm:$0xff]
    %v32 = vld [vmem:[%s1 + $0x8] sm:$0xff]
    %v33 = vld [vmem:[%s1 + $0x10] sm:$0xff]
    %v34 = vld [vmem:[%s1 + $0x18] sm:$0xff]
    %v35 = vld [vmem:[%s2] sm:$0xff]
    %v36 = vld [vmem:[%s2 + $0x8] sm:$0xff]
    %v37 = vld [vmem:[%s2 + $0x10] sm:$0xff]
    %v38 = vld [vmem:[%s2 + $0x18] sm:$0xff]
    %40 = vset.pattern.permute.xlu0 0
    %41 = vperm.xlu0 %40, %v35
    %v42 = vpop.permute.xlu0 %41
    %45 = vset.pattern.permute.xlu0 0
    %46 = vperm.xlu0 %45, %v36
    %v47 = vpop.permute.xlu0 %46
    %50 = vset.pattern.permute.xlu0 0
    %51 = vperm.xlu0 %50, %v37
    %v52 = vpop.permute.xlu0 %51
    %55 = vset.pattern.permute.xlu0 0
    %56 = vperm.xlu0 %55, %v38
    %v57 = vpop.permute.xlu0 %56
    %vm59 = vcmask 130048
    %v61 = vsel %vm59, %v31, 0
    %v64 = vsel %vm59, %v32, 0
    %v67 = vsel %vm59, %v33, 0
    %v70 = vsel %vm59, %v34, 0
    %72 = vmatprep.subr.mxu0 0.0
    %73 = vmatpush1.msra.mxu0 %v29
    %74 = vmatprep.subr.mxu0 0.0
    %75 = vmatpush1.msra.mxu0 %v30
    %76 = vmatprep.subr.mxu0 0.0
    %77 = vmatpush1.msra.mxu0 0.0
    %78 = vmatprep.subr.mxu0 0.0
    %79 = vmatpush1.msra.mxu0 0.0
    %80 = vmatprep.subr.mxu0 0.0
    %81 = vmatpush1.msra.mxu0 0.0
    %82 = vmatprep.subr.mxu0 0.0
    %83 = vmatpush1.msra.mxu0 0.0
    %84 = vmatprep.subr.mxu0 0.0
    %85 = vmatpush1.msra.mxu0 0.0
    %86 = vmatprep.subr.mxu0 0.0
    %87 = vmatpush1.msra.mxu0 0.0
    %88 = vmatprep.subr.mxu0 0.0
    %89 = vmatpush1.msra.mxu0 0.0
    %90 = vmatprep.subr.mxu0 0.0
    %91 = vmatpush1.msra.mxu0 0.0
    %92 = vmatprep.subr.mxu0 0.0
    %93 = vmatpush1.msra.mxu0 0.0
    %94 = vmatprep.subr.mxu0 0.0
    %95 = vmatpush1.msra.mxu0 0.0
    %96 = vmatprep.subr.mxu0 0.0
    %97 = vmatpush1.msra.mxu0 0.0
    %98 = vmatprep.subr.mxu0 0.0
    %99 = vmatpush1.msra.mxu0 0.0
    %100 = vmatprep.subr.mxu0 0.0
    %101 = vmatpush1.msra.mxu0 0.0
    %102 = vmatprep.subr.mxu0 0.0
    %103 = vmatpush1.msra.mxu0 0.0
    %104 = vmatprep.subr.mxu0 0.0
    %105 = vmatpush1.msra.mxu0 0.0
    %106 = vmatprep.subr.mxu0 0.0
    %107 = vmatpush1.msra.mxu0 0.0
    %108 = vmatprep.subr.mxu0 0.0
    %109 = vmatpush1.msra.mxu0 0.0
    %110 = vmatprep.subr.mxu0 0.0
    %111 = vmatpush1.msra.mxu0 0.0
    %112 = vmatprep.subr.mxu0 0.0
    %113 = vmatpush1.msra.mxu0 0.0
    %114 = vmatprep.subr.mxu0 0.0
    %115 = vmatpush1.msra.mxu0 0.0
    %116 = vmatprep.subr.mxu0 0.0
    %117 = vmatpush1.msra.mxu0 0.0
    %118 = vmatprep.subr.mxu0 0.0
    %119 = vmatpush1.msra.mxu0 0.0
    %120 = vmatprep.subr.mxu0 0.0
    %121 = vmatpush1.msra.mxu0 0.0
    %122 = vmatprep.subr.mxu0 0.0
    %123 = vmatpush1.msra.mxu0 0.0
    %124 = vmatprep.subr.mxu0 0.0
    %125 = vmatpush1.msra.mxu0 0.0
    %126 = vmatprep.subr.mxu0 0.0
    %127 = vmatpush1.msra.mxu0 0.0
    %128 = vmatprep.subr.mxu0 0.0
    %129 = vmatpush1.msra.mxu0 0.0
    %130 = vmatprep.subr.mxu0 0.0
    %131 = vmatpush1.msra.mxu0 0.0
    %132 = vmatprep.subr.mxu0 0.0
    %133 = vmatpush1.msra.mxu0 0.0
    %134 = vmatprep.subr.mxu0 0.0
    %135 = vmatpush1.msra.mxu0 0.0
    %136 = vmatprep.mubr.f32.mxu0 0.0
    %137 = vmatmul.mubr.f32.gmra.mrb[0].mxu0 %v61
    %v138 = vpop.f32.mrb[0].mxu0
    %v139 = vadd.f32 %v42, %v138
    %v140 = vpop.f32.mrb[0].mxu0
    %141 = vmatprep.mubr.f32.mxu0 0.0
    %142 = vmatmul.mubr.f32.gmra.mrb[0].mxu0 %v64
    %v143 = vpop.f32.mrb[0].mxu0
    %v144 = vadd.f32 %v47, %v143
    %v145 = vpop.f32.mrb[0].mxu0
    %146 = vmatprep.mubr.f32.mxu0 0.0
    %147 = vmatmul.mubr.f32.gmra.mrb[0].mxu0 %v67
    %v148 = vpop.f32.mrb[0].mxu0
    %v149 = vadd.f32 %v52, %v148
    %v150 = vpop.f32.mrb[0].mxu0
    %151 = vmatprep.mubr.f32.mxu0 0.0
    %152 = vmatmul.mubr.f32.gmra.mrb[0].mxu0 %v70
    %v153 = vpop.f32.mrb[0].mxu0
    %v154 = vadd.f32 %v57, %v153
    %v155 = vpop.f32.mrb[0].mxu0
    %156 = vdwg.mxu0
    %v157 = vmax.f32 %v139, 0.0
    %v158 = vmax.f32 %v144, 0.0
    %v159 = vmax.f32 %v149, 0.0
    %v160 = vmax.f32 %v154, 0.0
    %v161 = vld [vmem:[%s3] sm:$0xff]
    %v162 = vld [vmem:[%s3 + $0x8] sm:$0xff]
    %v163 = vld [vmem:[%s3 + $0x10] sm:$0xff]
    %v164 = vld [vmem:[%s3 + $0x18] sm:$0xff]
    %v165 = vld [vmem:[%s4] sm:$0xff]
    %v166 = vld [vmem:[%s4 + $0x8] sm:$0xff]
    %v167 = vld [vmem:[%s4 + $0x10] sm:$0xff]
    %v168 = vld [vmem:[%s4 + $0x18] sm:$0xff]
    %170 = vset.pattern.permute.xlu0 0
    %171 = vperm.xlu0 %170, %v165
    %v172 = vpop.permute.xlu0 %171
    %175 = vset.pattern.permute.xlu0 0
    %176 = vperm.xlu0 %175, %v166
    %v177 = vpop.permute.xlu0 %176
    %180 = vset.pattern.permute.xlu0 0
    %181 = vperm.xlu0 %180, %v167
    %v182 = vpop.permute.xlu0 %181
    %185 = vset.pattern.permute.xlu0 0
    %186 = vperm.xlu0 %185, %v168
    %v187 = vpop.permute.xlu0 %186
    %vm189 = vcmask 261120
    %v191 = vsel %vm189, %v161, 0
    %v194 = vsel %vm189, %v162, 0
    %v197 = vsel %vm189, %v163, 0
    %v200 = vsel %vm189, %v164, 0
    %202 = vmatprep.subr.mxu0 0.0
    %203 = vmatpush1.msra.mxu0 %v157
    %204 = vmatprep.subr.mxu0 0.0
    %205 = vmatpush1.msra.mxu0 %v158
    %206 = vmatprep.subr.mxu0 0.0
    %207 = vmatpush1.msra.mxu0 %v159
    %208 = vmatprep.subr.mxu0 0.0
    %209 = vmatpush1.msra.mxu0 %v160
    %210 = vmatprep.subr.mxu0 0.0
    %211 = vmatpush1.msra.mxu0 0.0
    %212 = vmatprep.subr.mxu0 0.0
    %213 = vmatpush1.msra.mxu0 0.0
    %214 = vmatprep.subr.mxu0 0.0
    %215 = vmatpush1.msra.mxu0 0.0
    %216 = vmatprep.subr.mxu0 0.0
    %217 = vmatpush1.msra.mxu0 0.0
    %218 = vmatprep.subr.mxu0 0.0
    %219 = vmatpush1.msra.mxu0 0.0
    %220 = vmatprep.subr.mxu0 0.0
    %221 = vmatpush1.msra.mxu0 0.0
    %222 = vmatprep.subr.mxu0 0.0
    %223 = vmatpush1.msra.mxu0 0.0
    %224 = vmatprep.subr.mxu0 0.0
    %225 = vmatpush1.msra.mxu0 0.0
    %226 = vmatprep.subr.mxu0 0.0
    %227 = vmatpush1.msra.mxu0 0.0
    %228 = vmatprep.subr.mxu0 0.0
    %229 = vmatpush1.msra.mxu0 0.0
    %230 = vmatprep.subr.mxu0 0.0
    %231 = vmatpush1.msra.mxu0 0.0
    %232 = vmatprep.subr.mxu0 0.0
    %233 = vmatpush1.msra.mxu0 0.0
    %234 = vmatprep.subr.mxu0 0.0
    %235 = vmatpush1.msra.mxu0 0.0
    %236 = vmatprep.subr.mxu0 0.0
    %237 = vmatpush1.msra.mxu0 0.0
    %238 = vmatprep.subr.mxu0 0.0
    %239 = vmatpush1.msra.mxu0 0.0
    %240 = vmatprep.subr.mxu0 0.0
    %241 = vmatpush1.msra.mxu0 0.0
    %242 = vmatprep.subr.mxu0 0.0
    %243 = vmatpush1.msra.mxu0 0.0
    %244 = vmatprep.subr.mxu0 0.0
    %245 = vmatpush1.msra.mxu0 0.0
    %246 = vmatprep.subr.mxu0 0.0
    %247 = vmatpush1.msra.mxu0 0.0
    %248 = vmatprep.subr.mxu0 0.0
    %249 = vmatpush1.msra.mxu0 0.0
    %250 = vmatprep.subr.mxu0 0.0
    %251 = vmatpush1.msra.mxu0 0.0
    %252 = vmatprep.subr.mxu0 0.0
    %253 = vmatpush1.msra.mxu0 0.0
    %254 = vmatprep.subr.mxu0 0.0
    %255 = vmatpush1.msra.mxu0 0.0
    %256 = vmatprep.subr.mxu0 0.0
    %257 = vmatpush1.msra.mxu0 0.0
    %258 = vmatprep.subr.mxu0 0.0
    %259 = vmatpush1.msra.mxu0 0.0
    %260 = vmatprep.subr.mxu0 0.0
    %261 = vmatpush1.msra.mxu0 0.0
    %262 = vmatprep.subr.mxu0 0.0
    %263 = vmatpush1.msra.mxu0 0.0
    %264 = vmatprep.subr.mxu0 0.0
    %265 = vmatpush1.msra.mxu0 0.0
    %266 = vmatprep.mubr.f32.mxu0 0.0
    %267 = vmatmul.mubr.f32.gmra.mrb[0].mxu0 %v191
    %v268 = vpop.f32.mrb[0].mxu0
    %v269 = vadd.f32 %v172, %v268
    %v270 = vpop.f32.mrb[0].mxu0
    %271 = vmatprep.mubr.f32.mxu0 0.0
    %272 = vmatmul.mubr.f32.gmra.mrb[0].mxu0 %v194
    %v273 = vpop.f32.mrb[0].mxu0
    %v274 = vadd.f32 %v177, %v273
    %v275 = vpop.f32.mrb[0].mxu0
    %276 = vmatprep.mubr.f32.mxu0 0.0
    %277 = vmatmul.mubr.f32.gmra.mrb[0].mxu0 %v197
    %v278 = vpop.f32.mrb[0].mxu0
    %v279 = vadd.f32 %v182, %v278
    %v280 = vpop.f32.mrb[0].mxu0
    %281 = vmatprep.mubr.f32.mxu0 0.0
    %282 = vmatmul.mubr.f32.gmra.mrb[0].mxu0 %v200
    %v283 = vpop.f32.mrb[0].mxu0
    %v284 = vadd.f32 %v187, %v283
    %v285 = vpop.f32.mrb[0].mxu0
    %286 = vdwg.mxu0
    %v287 = vmax.f32 %v269, 0.0
    %v288 = vmax.f32 %v274, 0.0
    %v289 = vmax.f32 %v279, 0.0
    %v290 = vmax.f32 %v284, 0.0
    %v291 = vld [vmem:[%s5] sm:$0x1]
    %v292 = vld [vmem:[#allocation2] sm:$0x1]
    %294 = vset.pattern.permute.xlu0 0
    %295 = vperm.xlu0 %294, %v292
    %v296 = vpop.permute.xlu0 %295
    %v298 = vlaneseq
    %v299 = vshrl.u32 %v298, 7
    %v300 = vsub.s32 0, %v299
    %v301 = vrot.slane %v296, %v300
    %v303 = vsel %vm189, %v291, 0
    %305 = vmatprep.subr.mxu0 0.0
    %306 = vmatpush1.msra.mxu0 %v287
    %307 = vmatprep.subr.mxu0 0.0
    %308 = vmatpush1.msra.mxu0 %v288
    %309 = vmatprep.subr.mxu0 0.0
    %310 = vmatpush1.msra.mxu0 %v289
    %311 = vmatprep.subr.mxu0 0.0
    %312 = vmatpush1.msra.mxu0 %v290
    %313 = vmatprep.subr.mxu0 0.0
    %314 = vmatpush1.msra.mxu0 0.0
    %315 = vmatprep.subr.mxu0 0.0
    %316 = vmatpush1.msra.mxu0 0.0
    %317 = vmatprep.subr.mxu0 0.0
    %318 = vmatpush1.msra.mxu0 0.0
    %319 = vmatprep.subr.mxu0 0.0
    %320 = vmatpush1.msra.mxu0 0.0
    %321 = vmatprep.subr.mxu0 0.0
    %322 = vmatpush1.msra.mxu0 0.0
    %323 = vmatprep.subr.mxu0 0.0
    %324 = vmatpush1.msra.mxu0 0.0
    %325 = vmatprep.subr.mxu0 0.0
    %326 = vmatpush1.msra.mxu0 0.0
    %327 = vmatprep.subr.mxu0 0.0
    %328 = vmatpush1.msra.mxu0 0.0
    %329 = vmatprep.subr.mxu0 0.0
    %330 = vmatpush1.msra.mxu0 0.0
    %331 = vmatprep.subr.mxu0 0.0
    %332 = vmatpush1.msra.mxu0 0.0
    %333 = vmatprep.subr.mxu0 0.0
    %334 = vmatpush1.msra.mxu0 0.0
    %335 = vmatprep.subr.mxu0 0.0
    %336 = vmatpush1.msra.mxu0 0.0
    %337 = vmatprep.subr.mxu0 0.0
    %338 = vmatpush1.msra.mxu0 0.0
    %339 = vmatprep.subr.mxu0 0.0
    %340 = vmatpush1.msra.mxu0 0.0
    %341 = vmatprep.subr.mxu0 0.0
    %342 = vmatpush1.msra.mxu0 0.0
    %343 = vmatprep.subr.mxu0 0.0
    %344 = vmatpush1.msra.mxu0 0.0
    %345 = vmatprep.subr.mxu0 0.0
    %346 = vmatpush1.msra.mxu0 0.0
    %347 = vmatprep.subr.mxu0 0.0
    %348 = vmatpush1.msra.mxu0 0.0
    %349 = vmatprep.subr.mxu0 0.0
    %350 = vmatpush1.msra.mxu0 0.0
    %351 = vmatprep.subr.mxu0 0.0
    %352 = vmatpush1.msra.mxu0 0.0
    %353 = vmatprep.subr.mxu0 0.0
    %354 = vmatpush1.msra.mxu0 0.0
    %355 = vmatprep.subr.mxu0 0.0
    %356 = vmatpush1.msra.mxu0 0.0
    %357 = vmatprep.subr.mxu0 0.0
    %358 = vmatpush1.msra.mxu0 0.0
    %359 = vmatprep.subr.mxu0 0.0
    %360 = vmatpush1.msra.mxu0 0.0
    %361 = vmatprep.subr.mxu0 0.0
    %362 = vmatpush1.msra.mxu0 0.0
    %363 = vmatprep.subr.mxu0 0.0
    %364 = vmatpush1.msra.mxu0 0.0
    %365 = vmatprep.subr.mxu0 0.0
    %366 = vmatpush1.msra.mxu0 0.0
    %367 = vmatprep.subr.mxu0 0.0
    %368 = vmatpush1.msra.mxu0 0.0
    %369 = vmatprep.mubr.f32.mxu0 0.0
    %370 = vmatmul.mubr.f32.gmra.mrb[0].mxu0 %v303
    %v371 = vpop.f32.mrb[0].mxu0
    %v372 = vadd.f32 %v301, %v371
    %v373 = vpop.f32.mrb[0].mxu0
    %374 = vdwg.mxu0
    %vm375 = vcmask 57344
    %376 = vst.msk [vmem:[#allocation3] sm:$0x1] %vm375, %v372
    // Predicated region
    $region30: #{tpu_custom_call.1} parent=1 // pred_check
      _
    $region31: #{tpu_custom_call.1} parent=1 // pred_check_branch
      %378 = sbr.rel (0) target = $region33
    $region32: #{tpu_custom_call.1} parent=1 // pred_region
      %s380 = ssub.s32 16, 16
      %381 = vsyncadd [#allocation4], %s380
      %s383 = sshll.u32 [#allocation3], 4
      %s384 = int_to_ptr.vmem [resolvable:$true] %s383
      %386 = dma.vmem_to_hbm [thread:$0]  %s384, 16, %s7, [#allocation4]
    $region33: #{tpu_custom_call.1} parent=1 // pred_fallthru
      _
    // Predicated region
    $region34: #{tpu_custom_call.1} parent=1 // pred_check
      _
    $region35: #{tpu_custom_call.1} parent=1 // pred_check_branch
      %388 = sbr.rel (0) target = $region37
    $region36: #{tpu_custom_call.1} parent=1 // pred_region
      %389 = dma.done [#allocation4], 16
    $region37: #{tpu_custom_call.1} parent=1 // pred_fallthru
      _
    %390 = vsyncpa [#allocation4], 1

</llo_original>
